<compile_context>
chip_gen: v5e
topology: v5e:2x2
jax: 0.10.0
libtpu: 0.0.40
codegen_flags: <defaults>
</compile_context>

<pallas_src>
import jax
import jax.numpy as jnp
from jax.experimental import pallas as pl
from jax.experimental.pallas import tpu as pltpu

_PI = 3.14159  # matches the literal in the torch.jit.script gaussian()
_SQRT_2PI = (2.0 * _PI) ** 0.5


def gaussian_layer_kernel(x_ref, mul_ref, bias_ref, means_ref, stds_ref, o_ref):
    x = x_ref[...]                               # (tm, 1) f32
    mul = mul_ref[...]                           # (tm, 1)
    bias = bias_ref[...]                         # (tm, 1)
    mean = means_ref[...]                        # (1, K)
    std = jnp.abs(stds_ref[...]) + 1e-5          # (1, K)
    inv_std = 1.0 / std                          # tiny per-step work
    coef = inv_std * (1.0 / _SQRT_2PI)           # 1 / (sqrt(2*pi) * std)

    v = mul * x + bias                           # (tm, 1)
    t = (v - mean) * inv_std                     # broadcast -> (tm, K)
    o_ref[...] = (jnp.exp(-0.5 * (t * t)) * coef).astype(o_ref.dtype)


def _round_up(n, m):
    return ((n + m - 1) // m) * m


def gaussian_layer(x, edge_type, means_w, stds_w, mul_w, bias_w, *, tm=512):
    """GaussianLayer forward.

    x:         (B, N, N) float distances
    edge_type: (B, N, N) int32 indices into the edge-type embeddings
    means_w, stds_w: (1, K)      (nn.Embedding(1, K).weight)
    mul_w, bias_w:   (E, 1)      (nn.Embedding(edge_types, 1).weight)
    returns (B, N, N, K) float32
    """
    B, N1, N2 = x.shape
    K = means_w.shape[-1]
    M = B * N1 * N2

    x_flat = x.reshape(M).astype(jnp.float32)
    et_flat = edge_type.reshape(M)
    # Embedding gather (M scalars) handled by XLA in the wrapper.
    mul_flat = mul_w[et_flat, 0].astype(jnp.float32)
    bias_flat = bias_w[et_flat, 0].astype(jnp.float32)

    # Large row tiles; pad ragged M instead of asserting divisibility.
    tm = min(tm, _round_up(M, 8))
    M_pad = _round_up(M, tm)
    pad = M_pad - M
    if pad:
        x_flat = jnp.pad(x_flat, (0, pad))
        mul_flat = jnp.pad(mul_flat, (0, pad))
        bias_flat = jnp.pad(bias_flat, (0, pad))

    x2 = x_flat.reshape(M_pad, 1)
    mul2 = mul_flat.reshape(M_pad, 1)
    bias2 = bias_flat.reshape(M_pad, 1)
    means2 = means_w.reshape(1, K).astype(jnp.float32)
    stds2 = stds_w.reshape(1, K).astype(jnp.float32)

    cost = pl.CostEstimate(
        flops=6 * M_pad * K,
        transcendentals=M_pad * K,
        bytes_accessed=4 * (3 * M_pad + 2 * K + M_pad * K),
    )

    out = pl.pallas_call(
        gaussian_layer_kernel,
        out_shape=jax.ShapeDtypeStruct((M_pad, K), jnp.float32),
        grid_spec=pl.GridSpec(
            grid=(M_pad // tm,),
            in_specs=[
                pl.BlockSpec((tm, 1), lambda i: (i, 0)),   # x rows
                pl.BlockSpec((tm, 1), lambda i: (i, 0)),   # mul rows
                pl.BlockSpec((tm, 1), lambda i: (i, 0)),   # bias rows
                pl.BlockSpec((1, K), lambda i: (0, 0)),    # means (resident)
                pl.BlockSpec((1, K), lambda i: (0, 0)),    # stds  (resident)
            ],
            out_specs=pl.BlockSpec((tm, K), lambda i: (i, 0)),
        ),
        compiler_params=pltpu.CompilerParams(
            dimension_semantics=("parallel",)),
        cost_estimate=cost,
    )(x2, mul2, bias2, means2, stds2)

    if pad:
        out = out[:M]
    return out.reshape(B, N1, N2, K)


def reference(x, edge_type, means_w, stds_w, mul_w, bias_w):
    mul = mul_w[edge_type, 0].astype(jnp.float32)      # (B, N, N)
    bias = bias_w[edge_type, 0].astype(jnp.float32)
    v = (mul * x.astype(jnp.float32) + bias)[..., None]  # (B, N, N, 1)
    mean = means_w.reshape(-1).astype(jnp.float32)       # (K,)
    std = jnp.abs(stds_w.reshape(-1)).astype(jnp.float32) + 1e-5
    return jnp.exp(-0.5 * ((v - mean) / std) ** 2) / (_SQRT_2PI * std)


if __name__ == "__main__":
    # Small shapes consistent with the module: K=128 basis, 1024 edge types.
    batch, n_atoms = 2, 8
    K, edge_types = 128, 1024

    key = jax.random.PRNGKey(0)
    kx, ke, km, ks, kmul, kbias = jax.random.split(key, 6)

    x = jax.random.uniform(kx, (batch, n_atoms, n_atoms), dtype=jnp.float32,
                           minval=0.0, maxval=6.0)
    edge_type = jax.random.randint(ke, (batch, n_atoms, n_atoms), 0, edge_types,
                                   dtype=jnp.int32)

    # Embedding tables (module default init is means/stds ~ U(0,3), mul=1,
    # bias=0; use nontrivial mul/bias so the gather path is actually checked).
    means_w = jax.random.uniform(km, (1, K), dtype=jnp.float32, minval=0.0, maxval=3.0)
    stds_w = jax.random.uniform(ks, (1, K), dtype=jnp.float32, minval=0.0, maxval=3.0)
    mul_w = 1.0 + 0.2 * jax.random.normal(kmul, (edge_types, 1), dtype=jnp.float32)
    bias_w = 0.1 * jax.random.normal(kbias, (edge_types, 1), dtype=jnp.float32)

    out = gaussian_layer(x, edge_type, means_w, stds_w, mul_w, bias_w)
    jax.block_until_ready(out)

    ref = reference(x, edge_type, means_w, stds_w, mul_w, bias_w)
    assert out.shape == (batch, n_atoms, n_atoms, K)
    assert jnp.allclose(out, ref, atol=1e-5, rtol=1e-5), "mismatch vs reference"

    print("KERNEL_OK")
</pallas_src>

<mosaic_0001>
module attributes {stable_mosaic.version = 11 : i64} {
  func.func @gaussian_layer_kernel(%arg0: i32, %arg1: memref<128x1xf32, #tpu.memory_space<vmem>>, %arg2: memref<128x1xf32, #tpu.memory_space<vmem>>, %arg3: memref<128x1xf32, #tpu.memory_space<vmem>>, %arg4: memref<1x128xf32, #tpu.memory_space<vmem>>, %arg5: memref<1x128xf32, #tpu.memory_space<vmem>>, %arg6: memref<128x128xf32, #tpu.memory_space<vmem>>) attributes {dimension_semantics = [#tpu.dimension_semantics<parallel>], iteration_bounds = array<i64: 1>, scalar_prefetch = 0 : i64, scratch_operands = 0 : i64, tpu.core_type = #tpu.core_type<tc>, window_params = [{transform_indices = @transform_0, window_bounds = array<i64: 128, 1>}, {transform_indices = @transform_1, window_bounds = array<i64: 128, 1>}, {transform_indices = @transform_2, window_bounds = array<i64: 128, 1>}, {pipeline_mode = #tpu.pipeline_mode<synchronous>, transform_indices = @transform_3, window_bounds = array<i64: 1, 128>}, {pipeline_mode = #tpu.pipeline_mode<synchronous>, transform_indices = @transform_4, window_bounds = array<i64: 1, 128>}, {transform_indices = @transform_5, window_bounds = array<i64: 128, 128>}]} {
    %c0 = arith.constant 0 : index
    %c0_0 = arith.constant 0 : index
    %0 = vector.load %arg1[%c0, %c0_0] : memref<128x1xf32, #tpu.memory_space<vmem>>, vector<128x1xf32>
    %c0_1 = arith.constant 0 : index
    %c0_2 = arith.constant 0 : index
    %1 = vector.load %arg2[%c0_1, %c0_2] : memref<128x1xf32, #tpu.memory_space<vmem>>, vector<128x1xf32>
    %c0_3 = arith.constant 0 : index
    %c0_4 = arith.constant 0 : index
    %2 = vector.load %arg3[%c0_3, %c0_4] : memref<128x1xf32, #tpu.memory_space<vmem>>, vector<128x1xf32>
    %c0_5 = arith.constant 0 : index
    %c0_6 = arith.constant 0 : index
    %3 = vector.load %arg4[%c0_5, %c0_6] : memref<1x128xf32, #tpu.memory_space<vmem>>, vector<1x128xf32>
    %c0_7 = arith.constant 0 : index
    %c0_8 = arith.constant 0 : index
    %4 = vector.load %arg5[%c0_7, %c0_8] : memref<1x128xf32, #tpu.memory_space<vmem>>, vector<1x128xf32>
    %5 = math.absf %4 : vector<1x128xf32>
    %cst = arith.constant 9.99999974E-6 : f32
    %6 = vector.broadcast %cst : f32 to vector<1x128xf32>
    %7 = arith.addf %5, %6 : vector<1x128xf32>
    %cst_9 = arith.constant 1.000000e+00 : f32
    %8 = vector.broadcast %cst_9 : f32 to vector<1x128xf32>
    %9 = arith.divf %8, %7 : vector<1x128xf32>
    %cst_10 = arith.constant 0.398942441 : f32
    %10 = vector.broadcast %cst_10 : f32 to vector<1x128xf32>
    %11 = arith.mulf %9, %10 : vector<1x128xf32>
    %12 = arith.mulf %1, %0 : vector<128x1xf32>
    %13 = arith.addf %12, %2 : vector<128x1xf32>
    %14 = vector.broadcast %13 : vector<128x1xf32> to vector<128x128xf32>
    %15 = vector.broadcast %3 : vector<1x128xf32> to vector<128x128xf32>
    %16 = arith.subf %14, %15 : vector<128x128xf32>
    %17 = vector.broadcast %9 : vector<1x128xf32> to vector<128x128xf32>
    %18 = arith.mulf %16, %17 : vector<128x128xf32>
    %19 = arith.mulf %18, %18 : vector<128x128xf32>
    %cst_11 = arith.constant -5.000000e-01 : f32
    %20 = vector.broadcast %cst_11 : f32 to vector<128x128xf32>
    %21 = arith.mulf %20, %19 : vector<128x128xf32>
    %22 = math.exp %21 : vector<128x128xf32>
    %23 = vector.broadcast %11 : vector<1x128xf32> to vector<128x128xf32>
    %24 = arith.mulf %22, %23 : vector<128x128xf32>
    %c0_12 = arith.constant 0 : index
    %c0_13 = arith.constant 0 : index
    %25 = vector.load %arg6[%c0_12, %c0_13] : memref<128x128xf32, #tpu.memory_space<vmem>>, vector<128x128xf32>
    tpu.vector_store %arg6[%c0_12, %c0_13], %24 {strides = array<i32>} : memref<128x128xf32, #tpu.memory_space<vmem>>, vector<128x128xf32>,
    return
  }
  func.func @transform_0(%arg0: i32) -> (i32, i32) {
    %c0_i32 = arith.constant 0 : i32
    %c0_i32_0 = arith.constant 0 : i32
    return %arg0, %c0_i32 : i32, i32
  }
  func.func @transform_1(%arg0: i32) -> (i32, i32) {
    %c0_i32 = arith.constant 0 : i32
    %c0_i32_0 = arith.constant 0 : i32
    return %arg0, %c0_i32 : i32, i32
  }
  func.func @transform_2(%arg0: i32) -> (i32, i32) {
    %c0_i32 = arith.constant 0 : i32
    %c0_i32_0 = arith.constant 0 : i32
    return %arg0, %c0_i32 : i32, i32
  }
  func.func @transform_3(%arg0: i32) -> (i32, i32) {
    %c0_i32 = arith.constant 0 : i32
    %c0_i32_0 = arith.constant 0 : i32
    %c0_i32_1 = arith.constant 0 : i32
    return %c0_i32, %c0_i32_0 : i32, i32
  }
  func.func @transform_4(%arg0: i32) -> (i32, i32) {
    %c0_i32 = arith.constant 0 : i32
    %c0_i32_0 = arith.constant 0 : i32
    %c0_i32_1 = arith.constant 0 : i32
    return %c0_i32, %c0_i32_0 : i32, i32
  }
  func.func @transform_5(%arg0: i32) -> (i32, i32) {
    %c0_i32 = arith.constant 0 : i32
    %c0_i32_0 = arith.constant 0 : i32
    return %arg0, %c0_i32 : i32, i32
  }
}

</mosaic_0001>

<llo_original>
// kernel: tpu_custom_call.1
$region0: #{tpu_custom_call.1}
  #allocation0 [shape = 'u32[]', space=smem, size = 0x4, offset = 0x4, fixed_abs, tag = 'smem constant byte address 0x4 - core index']
  #allocation1 [shape = 'u32[72,128]{1,0:T(1,128)}', space=vmem, size = 0x9000, scoped, tag = 'internal scratch']
  %s0 = inlined_call_operand.vmem [shape: f32[128,1], index: 0, kind: input, shape index: {}]
  %s1 = inlined_call_operand.vmem [shape: f32[128,1], index: 1, kind: input, shape index: {}]
  %s2 = inlined_call_operand.vmem [shape: f32[128,1], index: 2, kind: input, shape index: {}]
  %s3 = inlined_call_operand.vmem [shape: f32[1,128], index: 3, kind: input, shape index: {}]
  %s4 = inlined_call_operand.vmem [shape: f32[1,128], index: 4, kind: input, shape index: {}]
  %s5 = inlined_call_operand.hbm [shape: f32[128,128], index: 5, kind: output, shape index: {}]
  %s6 = sld [smem:[#allocation0]]
  $region30: #{tpu_custom_call.1} parent=0
    _
  %s8 = ssub.s32 1, %s6
  %s9 = scalar_select 0, %s8, %s6
  $region1: #{tpu_custom_call.1} parent=0
    #allocation2 [shape = 'u8[65536]{0}', space=vmem, size = 0x10000, scoped, tag = 'output window, operand 0, single buffered']
    #allocation3 [shape = 's32[1]{0}', space=sflag, size = 0x4, scoped, tag = 'scoped memory for tpu_custom_call.1']
    %10 = vsyncpa [#allocation3], 0
    // Predicated region
    $region2: #{tpu_custom_call.1} parent=1 // pred_check
      _
    $region3: #{tpu_custom_call.1} parent=1 // pred_check_branch
      %12 = sbr.rel (0) target = $region5
    $region4: #{tpu_custom_call.1} parent=1 // pred_region
      _
    $region5: #{tpu_custom_call.1} parent=1 // pred_fallthru
      _
    // Predicated region
    $region6: #{tpu_custom_call.1} parent=1 // pred_check
      _
    $region7: #{tpu_custom_call.1} parent=1 // pred_check_branch
      %14 = sbr.rel (0) target = $region9
    $region8: #{tpu_custom_call.1} parent=1 // pred_region
      _
    $region9: #{tpu_custom_call.1} parent=1 // pred_fallthru
      _
    // Predicated region
    $region10: #{tpu_custom_call.1} parent=1 // pred_check
      _
    $region11: #{tpu_custom_call.1} parent=1 // pred_check_branch
      %16 = sbr.rel (0) target = $region13
    $region12: #{tpu_custom_call.1} parent=1 // pred_region
      _
    $region13: #{tpu_custom_call.1} parent=1 // pred_fallthru
      _
    // Predicated region
    $region14: #{tpu_custom_call.1} parent=1 // pred_check
      _
    $region15: #{tpu_custom_call.1} parent=1 // pred_check_branch
      %18 = sbr.rel (0) target = $region17
    $region16: #{tpu_custom_call.1} parent=1 // pred_region
      _
    $region17: #{tpu_custom_call.1} parent=1 // pred_fallthru
      _
    // Predicated region
    $region18: #{tpu_custom_call.1} parent=1 // pred_check
      _
    $region19: #{tpu_custom_call.1} parent=1 // pred_check_branch
      %20 = sbr.rel (0) target = $region21
    $region20: #{tpu_custom_call.1} parent=1 // pred_region
      _
    $region21: #{tpu_custom_call.1} parent=1 // pred_fallthru
      _
    %v21 = vld [vmem:[%s0] sm:$0xff]
    %v22 = vld [vmem:[%s0 + $0x8] sm:$0xff]
    %v23 = vld [vmem:[%s0 + $0x10] sm:$0xff]
    %v24 = vld [vmem:[%s0 + $0x18] sm:$0xff]
    %v25 = vld [vmem:[%s0 + $0x20] sm:$0xff]
    %v26 = vld [vmem:[%s0 + $0x28] sm:$0xff]
    %v27 = vld [vmem:[%s0 + $0x30] sm:$0xff]
    %v28 = vld [vmem:[%s0 + $0x38] sm:$0xff]
    %v29 = vld [vmem:[%s0 + $0x40] sm:$0xff]
    %v30 = vld [vmem:[%s0 + $0x48] sm:$0xff]
    %v31 = vld [vmem:[%s0 + $0x50] sm:$0xff]
    %v32 = vld [vmem:[%s0 + $0x58] sm:$0xff]
    %v33 = vld [vmem:[%s0 + $0x60] sm:$0xff]
    %v34 = vld [vmem:[%s0 + $0x68] sm:$0xff]
    %v35 = vld [vmem:[%s0 + $0x70] sm:$0xff]
    %v36 = vld [vmem:[%s0 + $0x78] sm:$0xff]
    %v37 = vld [vmem:[%s1] sm:$0xff]
    %v38 = vld [vmem:[%s1 + $0x8] sm:$0xff]
    %v39 = vld [vmem:[%s1 + $0x10] sm:$0xff]
    %v40 = vld [vmem:[%s1 + $0x18] sm:$0xff]
    %v41 = vld [vmem:[%s1 + $0x20] sm:$0xff]
    %v42 = vld [vmem:[%s1 + $0x28] sm:$0xff]
    %v43 = vld [vmem:[%s1 + $0x30] sm:$0xff]
    %v44 = vld [vmem:[%s1 + $0x38] sm:$0xff]
    %v45 = vld [vmem:[%s1 + $0x40] sm:$0xff]
    %v46 = vld [vmem:[%s1 + $0x48] sm:$0xff]
    %v47 = vld [vmem:[%s1 + $0x50] sm:$0xff]
    %v48 = vld [vmem:[%s1 + $0x58] sm:$0xff]
    %v49 = vld [vmem:[%s1 + $0x60] sm:$0xff]
    %v50 = vld [vmem:[%s1 + $0x68] sm:$0xff]
    %v51 = vld [vmem:[%s1 + $0x70] sm:$0xff]
    %v52 = vld [vmem:[%s1 + $0x78] sm:$0xff]
    %v53 = vld [vmem:[%s2] sm:$0xff]
    %v54 = vld [vmem:[%s2 + $0x8] sm:$0xff]
    %v55 = vld [vmem:[%s2 + $0x10] sm:$0xff]
    %v56 = vld [vmem:[%s2 + $0x18] sm:$0xff]
    %v57 = vld [vmem:[%s2 + $0x20] sm:$0xff]
    %v58 = vld [vmem:[%s2 + $0x28] sm:$0xff]
    %v59 = vld [vmem:[%s2 + $0x30] sm:$0xff]
    %v60 = vld [vmem:[%s2 + $0x38] sm:$0xff]
    %v61 = vld [vmem:[%s2 + $0x40] sm:$0xff]
    %v62 = vld [vmem:[%s2 + $0x48] sm:$0xff]
    %v63 = vld [vmem:[%s2 + $0x50] sm:$0xff]
    %v64 = vld [vmem:[%s2 + $0x58] sm:$0xff]
    %v65 = vld [vmem:[%s2 + $0x60] sm:$0xff]
    %v66 = vld [vmem:[%s2 + $0x68] sm:$0xff]
    %v67 = vld [vmem:[%s2 + $0x70] sm:$0xff]
    %v68 = vld [vmem:[%s2 + $0x78] sm:$0xff]
    %v69 = vld [vmem:[%s3] sm:$0x1]
    %v70 = vld [vmem:[%s4] sm:$0x1]
    %v71 = vand.u32 2147483647, %v70
    %v72 = vadd.f32 %v71, 1e-05
    %v73 = vrcp.pop %v72
    %v74 = vmul.f32 %v72, %v73
    %v75 = vsub.f32 1.0, %v74
    %v76 = vmul.f32 %v73, %v75
    %v77 = vadd.f32 %v73, %v76
    %vm78 = vweird.f32 %v72
    %vm79 = vweird.f32 %v73
    %vm80 = vmor %vm78, %vm79
    %v81 = vsel %vm80, %v73, %v77
    %v82 = vand.u32 2147483647, %v72
    %vm83 = vcmp.eq.f32.partialorder %v82, 8.507059e+37
    %v84 = vand.u32 %v72, 2147483648
    %v85 = vor.u32 1.1754944e-38, %v84
    %v86 = vsel %vm83, %v85, %v81
    %v87 = vmul.f32 1.0, %v86
    %v88 = vmul.f32 %v87, 0.39894244
    %v89 = vmul.f32 %v37, %v21
    %v90 = vmul.f32 %v38, %v22
    %v91 = vmul.f32 %v39, %v23
    %v92 = vmul.f32 %v40, %v24
    %v93 = vmul.f32 %v41, %v25
    %v94 = vmul.f32 %v42, %v26
    %v95 = vmul.f32 %v43, %v27
    %v96 = vmul.f32 %v44, %v28
    %v97 = vmul.f32 %v45, %v29
    %v98 = vmul.f32 %v46, %v30
    %v99 = vmul.f32 %v47, %v31
    %v100 = vmul.f32 %v48, %v32
    %v101 = vmul.f32 %v49, %v33
    %v102 = vmul.f32 %v50, %v34
    %v103 = vmul.f32 %v51, %v35
    %v104 = vmul.f32 %v52, %v36
    %v105 = vadd.f32 %v89, %v53
    %v106 = vadd.f32 %v90, %v54
    %v107 = vadd.f32 %v91, %v55
    %v108 = vadd.f32 %v92, %v56
    %v109 = vadd.f32 %v93, %v57
    %v110 = vadd.f32 %v94, %v58
    %v111 = vadd.f32 %v95, %v59
    %v112 = vadd.f32 %v96, %v60
    %v113 = vadd.f32 %v97, %v61
    %v114 = vadd.f32 %v98, %v62
    %v115 = vadd.f32 %v99, %v63
    %v116 = vadd.f32 %v100, %v64
    %v117 = vadd.f32 %v101, %v65
    %v118 = vadd.f32 %v102, %v66
    %v119 = vadd.f32 %v103, %v67
    %v120 = vadd.f32 %v104, %v68
    %122 = vset.pattern.permute.xlu0 0
    %123 = vperm.xlu0 %122, %v105
    %v124 = vpop.permute.xlu0 %123
    %127 = vset.pattern.permute.xlu0 0
    %128 = vperm.xlu0 %127, %v106
    %v129 = vpop.permute.xlu0 %128
    %132 = vset.pattern.permute.xlu0 0
    %133 = vperm.xlu0 %132, %v107
    %v134 = vpop.permute.xlu0 %133
    %137 = vset.pattern.permute.xlu0 0
    %138 = vperm.xlu0 %137, %v108
    %v139 = vpop.permute.xlu0 %138
    %142 = vset.pattern.permute.xlu0 0
    %143 = vperm.xlu0 %142, %v109
    %v144 = vpop.permute.xlu0 %143
    %147 = vset.pattern.permute.xlu0 0
    %148 = vperm.xlu0 %147, %v110
    %v149 = vpop.permute.xlu0 %148
    %152 = vset.pattern.permute.xlu0 0
    %153 = vperm.xlu0 %152, %v111
    %v154 = vpop.permute.xlu0 %153
    %157 = vset.pattern.permute.xlu0 0
    %158 = vperm.xlu0 %157, %v112
    %v159 = vpop.permute.xlu0 %158
    %162 = vset.pattern.permute.xlu0 0
    %163 = vperm.xlu0 %162, %v113
    %v164 = vpop.permute.xlu0 %163
    %167 = vset.pattern.permute.xlu0 0
    %168 = vperm.xlu0 %167, %v114
    %v169 = vpop.permute.xlu0 %168
    %172 = vset.pattern.permute.xlu0 0
    %173 = vperm.xlu0 %172, %v115
    %v174 = vpop.permute.xlu0 %173
    %177 = vset.pattern.permute.xlu0 0
    %178 = vperm.xlu0 %177, %v116
    %v179 = vpop.permute.xlu0 %178
    %182 = vset.pattern.permute.xlu0 0
    %183 = vperm.xlu0 %182, %v117
    %v184 = vpop.permute.xlu0 %183
    %187 = vset.pattern.permute.xlu0 0
    %188 = vperm.xlu0 %187, %v118
    %v189 = vpop.permute.xlu0 %188
    %192 = vset.pattern.permute.xlu0 0
    %193 = vperm.xlu0 %192, %v119
    %v194 = vpop.permute.xlu0 %193
    %197 = vset.pattern.permute.xlu0 0
    %198 = vperm.xlu0 %197, %v120
    %v199 = vpop.permute.xlu0 %198
    %v202 = vperm.slane %v69, 0
    %v204 = vsub.f32 %v124, %v202
    %v205 = vsub.f32 %v129, %v202
    %v206 = vsub.f32 %v134, %v202
    %v207 = vsub.f32 %v139, %v202
    %v208 = vsub.f32 %v144, %v202
    %v209 = vsub.f32 %v149, %v202
    %v210 = vsub.f32 %v154, %v202
    %v211 = vsub.f32 %v159, %v202
    %v212 = vsub.f32 %v164, %v202
    %v213 = vsub.f32 %v169, %v202
    %v214 = vsub.f32 %v174, %v202
    %v215 = vsub.f32 %v179, %v202
    %v216 = vsub.f32 %v184, %v202
    %v217 = vsub.f32 %v189, %v202
    %v218 = vsub.f32 %v194, %v202
    %v219 = vsub.f32 %v199, %v202
    %v221 = vperm.slane %v87, 0
    %v223 = vmul.f32 %v204, %v221
    %v224 = vmul.f32 %v205, %v221
    %v225 = vmul.f32 %v206, %v221
    %v226 = vmul.f32 %v207, %v221
    %v227 = vmul.f32 %v208, %v221
    %v228 = vmul.f32 %v209, %v221
    %v229 = vmul.f32 %v210, %v221
    %v230 = vmul.f32 %v211, %v221
    %v231 = vmul.f32 %v212, %v221
    %v232 = vmul.f32 %v213, %v221
    %v233 = vmul.f32 %v214, %v221
    %v234 = vmul.f32 %v215, %v221
    %v235 = vmul.f32 %v216, %v221
    %v236 = vmul.f32 %v217, %v221
    %v237 = vmul.f32 %v218, %v221
    %v238 = vmul.f32 %v219, %v221
    %v239 = vmul.f32 %v223, %v223
    %v240 = vmul.f32 %v224, %v224
    %v241 = vmul.f32 %v225, %v225
    %v242 = vmul.f32 %v226, %v226
    %v243 = vmul.f32 %v227, %v227
    %v244 = vmul.f32 %v228, %v228
    %v245 = vmul.f32 %v229, %v229
    %v246 = vmul.f32 %v230, %v230
    %v247 = vmul.f32 %v231, %v231
    %v248 = vmul.f32 %v232, %v232
    %v249 = vmul.f32 %v233, %v233
    %v250 = vmul.f32 %v234, %v234
    %v251 = vmul.f32 %v235, %v235
    %v252 = vmul.f32 %v236, %v236
    %v253 = vmul.f32 %v237, %v237
    %v254 = vmul.f32 %v238, %v238
    %v255 = vmul.f32 %v239, -0.5
    %v256 = vmul.f32 %v240, -0.5
    %v257 = vmul.f32 %v241, -0.5
    %v258 = vmul.f32 %v242, -0.5
    %v259 = vmul.f32 %v243, -0.5
    %v260 = vmul.f32 %v244, -0.5
    %v261 = vmul.f32 %v245, -0.5
    %v262 = vmul.f32 %v246, -0.5
    %v263 = vmul.f32 %v247, -0.5
    %v264 = vmul.f32 %v248, -0.5
    %v265 = vmul.f32 %v249, -0.5
    %v266 = vmul.f32 %v250, -0.5
    %v267 = vmul.f32 %v251, -0.5
    %v268 = vmul.f32 %v252, -0.5
    %v269 = vmul.f32 %v253, -0.5
    %v270 = vmul.f32 %v254, -0.5
    %v271 = vmul.f32 %v255, 1.442695
    %v272 = vpow.pop %v271
    %v273 = vmul.f32 %v256, 1.442695
    %v274 = vpow.pop %v273
    %v275 = vmul.f32 %v257, 1.442695
    %v276 = vpow.pop %v275
    %v277 = vmul.f32 %v258, 1.442695
    %v278 = vpow.pop %v277
    %v279 = vmul.f32 %v259, 1.442695
    %v280 = vpow.pop %v279
    %v281 = vmul.f32 %v260, 1.442695
    %v282 = vpow.pop %v281
    %v283 = vmul.f32 %v261, 1.442695
    %v284 = vpow.pop %v283
    %v285 = vmul.f32 %v262, 1.442695
    %v286 = vpow.pop %v285
    %v287 = vmul.f32 %v263, 1.442695
    %v288 = vpow.pop %v287
    %v289 = vmul.f32 %v264, 1.442695
    %v290 = vpow.pop %v289
    %v291 = vmul.f32 %v265, 1.442695
    %v292 = vpow.pop %v291
    %v293 = vmul.f32 %v266, 1.442695
    %v294 = vpow.pop %v293
    %v295 = vmul.f32 %v267, 1.442695
    %v296 = vpow.pop %v295
    %v297 = vmul.f32 %v268, 1.442695
    %v298 = vpow.pop %v297
    %v299 = vmul.f32 %v269, 1.442695
    %v300 = vpow.pop %v299
    %v301 = vmul.f32 %v270, 1.442695
    %v302 = vpow.pop %v301
    %v304 = vperm.slane %v88, 0
    %v306 = vmul.f32 %v272, %v304
    %v307 = vmul.f32 %v274, %v304
    %v308 = vmul.f32 %v276, %v304
    %v309 = vmul.f32 %v278, %v304
    %v310 = vmul.f32 %v280, %v304
    %v311 = vmul.f32 %v282, %v304
    %v312 = vmul.f32 %v284, %v304
    %v313 = vmul.f32 %v286, %v304
    %v314 = vmul.f32 %v288, %v304
    %v315 = vmul.f32 %v290, %v304
    %v316 = vmul.f32 %v292, %v304
    %v317 = vmul.f32 %v294, %v304
    %v318 = vmul.f32 %v296, %v304
    %v319 = vmul.f32 %v298, %v304
    %v320 = vmul.f32 %v300, %v304
    %v321 = vmul.f32 %v302, %v304
    %322 = vst [vmem:[#allocation2] sm:$0xff] %v306
    %323 = vst [vmem:[#allocation2 + $0x8] sm:$0xff] %v307
    %324 = vst [vmem:[#allocation2 + $0x10] sm:$0xff] %v308
    %325 = vst [vmem:[#allocation2 + $0x18] sm:$0xff] %v309
    %326 = vst [vmem:[#allocation2 + $0x20] sm:$0xff] %v310
    %327 = vst [vmem:[#allocation2 + $0x28] sm:$0xff] %v311
    %328 = vst [vmem:[#allocation2 + $0x30] sm:$0xff] %v312
    %329 = vst [vmem:[#allocation2 + $0x38] sm:$0xff] %v313
    %330 = vst [vmem:[#allocation2 + $0x40] sm:$0xff] %v314
    %331 = vst [vmem:[#allocation2 + $0x48] sm:$0xff] %v315
    %332 = vst [vmem:[#allocation2 + $0x50] sm:$0xff] %v316
    %333 = vst [vmem:[#allocation2 + $0x58] sm:$0xff] %v317
    %334 = vst [vmem:[#allocation2 + $0x60] sm:$0xff] %v318
    %335 = vst [vmem:[#allocation2 + $0x68] sm:$0xff] %v319
    %336 = vst [vmem:[#allocation2 + $0x70] sm:$0xff] %v320
    %337 = vst [vmem:[#allocation2 + $0x78] sm:$0xff] %v321
    // Predicated region
    $region22: #{tpu_custom_call.1} parent=1 // pred_check
      _
    $region23: #{tpu_custom_call.1} parent=1 // pred_check_branch
      %339 = sbr.rel (0) target = $region25
    $region24: #{tpu_custom_call.1} parent=1 // pred_region
      %341 = vsyncadd [#allocation3], 0
      %s342 = sshll.u32 [#allocation2], 4
      %s343 = int_to_ptr.vmem [resolvable:$true] %s342
      %s344 = sshll.u32 %s5, 4
      %s345 = int_to_ptr.hbm [resolvable:$true] %s344
      %350 = dma.vmem_to_hbm [thread:$0]  %s343, 2048, %s345, [#allocation3], 128, 128, 8
    $region25: #{tpu_custom_call.1} parent=1 // pred_fallthru
      _
    // Predicated region
    $region26: #{tpu_custom_call.1} parent=1 // pred_check
      _
    $region27: #{tpu_custom_call.1} parent=1 // pred_check_branch
      %352 = sbr.rel (0) target = $region29
    $region28: #{tpu_custom_call.1} parent=1 // pred_region
      %354 = dma.done [#allocation3], 2048
    $region29: #{tpu_custom_call.1} parent=1 // pred_fallthru
      _
    %355 = vsyncpa [#allocation3], 1

</llo_original>
